<compile_context>
chip_gen: v5e
topology: v5e:2x2
jax: 0.10.0
libtpu: 0.0.40
codegen_flags: <defaults>
</compile_context>

<pallas_src>
import functools

import jax
import jax.numpy as jnp
from jax.experimental import pallas as pl
from jax.experimental.pallas import tpu as pltpu


def _round_up(x, m):
    return (x + m - 1) // m * m


def _emb_gather_kernel(xe_ref, roff_ref, tab_hbm, out_ref, row_buf, sems, *, tb):
    # xe_ref  : (F, B_pad) int32  SMEM  scalar-prefetched indices
    # roff_ref: (F,)       int32  SMEM  row offset of each feature's table
    # tab_hbm : (R_total, e_pad)  f32   concatenated embedding tables (HBM)
    # out_ref : (tb, e_pad)       f32   output block for (batch tile, feature)
    # row_buf : (tb, e_pad)       f32   VMEM landing buffer for gathered rows
    # sems    : (tb,)                   DMA semaphores, one per in-flight row
    bt = pl.program_id(0)
    f = pl.program_id(1)
    base = roff_ref[f]
    col0 = bt * tb

    # Issue all row gathers for this tile up front so the DMAs overlap.
    for i in range(tb):
        r = base + xe_ref[f, col0 + i]
        pltpu.make_async_copy(
            tab_hbm.at[pl.ds(r, 1), :],
            row_buf.at[pl.ds(i, 1), :],
            sems.at[i],
        ).start()

    # Wait for all of them (wait descriptor only needs a shape-matching copy).
    for i in range(tb):
        pltpu.make_async_copy(
            tab_hbm.at[pl.ds(0, 1), :],
            row_buf.at[pl.ds(i, 1), :],
            sems.at[i],
        ).wait()

    # Lane-dense store of the whole (tb, e_pad) block.
    out_ref[...] = row_buf[...]


@functools.partial(jax.jit, static_argnames=("emb_sizes",))
def emb_transform(xe, tab_cat, row_offsets, emb_sizes):
    """xe: (B, F) int; tab_cat: (sum(num_uniqs), e_pad) f32; row_offsets: (F,) i32."""
    batch, num_feats = xe.shape
    e_pad = tab_cat.shape[1]

    b8 = _round_up(max(batch, 8), 8)
    tb = b8 if b8 <= 32 else 32              # rows gathered / DMAs in flight per step
    b_pad = _round_up(b8, tb)
    n_bt = b_pad // tb

    # (F, B_pad) int32, scalar-prefetched into SMEM (long axis last). Padding
    # rows gather row `base + 0` (always valid) and are sliced away afterwards.
    xe_t = jnp.zeros((num_feats, b_pad), jnp.int32).at[:, :batch].set(
        xe.astype(jnp.int32).T
    )

    out_padded = pl.pallas_call(
        functools.partial(_emb_gather_kernel, tb=tb),
        out_shape=jax.ShapeDtypeStruct((b_pad, num_feats * e_pad), jnp.float32),
        grid_spec=pltpu.PrefetchScalarGridSpec(
            num_scalar_prefetch=2,                       # xe_t, row_offsets
            grid=(n_bt, num_feats),
            in_specs=[pl.BlockSpec(memory_space=pl.ANY)],  # table stays in HBM
            out_specs=pl.BlockSpec(
                (tb, e_pad), lambda bt, f, xe_r, off_r: (bt, f)
            ),
            scratch_shapes=[
                pltpu.VMEM((tb, e_pad), jnp.float32),
                pltpu.SemaphoreType.DMA((tb,)),
            ],
        ),
        compiler_params=pltpu.CompilerParams(
            dimension_semantics=("parallel", "parallel"),
        ),
    )(xe_t, row_offsets, tab_cat)

    # Glue: drop lane padding per feature and concat to (B, sum(emb_sizes)).
    # TODO(synk): writing the exact-width concatenated output directly from the
    # kernel needs per-feature variable-width output blocks, which BlockSpec
    # cannot express; this slice+concat is one cheap JAX pass over tiny data.
    pieces = [
        out_padded[:batch, f * e_pad : f * e_pad + emb_sizes[f]]
        for f in range(num_feats)
    ]
    return jnp.concatenate(pieces, axis=1)


def build_emb_transform(num_uniqs, key, emb_sizes=None):
    """nn.Embedding-style N(0,1) init. Tables are concatenated row-wise with
    exact cumulative row offsets (no vocab padding); only the embedding (lane)
    dim is padded to a common multiple of 128."""
    if emb_sizes is None:
        emb_sizes = [min(50, 1 + v // 2) for v in num_uniqs]
    num_feats = len(num_uniqs)
    e_pad = _round_up(max(emb_sizes), 128)

    row_offsets = []
    off = 0
    for nu in num_uniqs:
        row_offsets.append(off)
        off += nu
    total_rows = off

    keys = jax.random.split(key, num_feats)
    tables = []
    tab_cat = jnp.zeros((total_rows, e_pad), jnp.float32)
    for i, (nu, es) in enumerate(zip(num_uniqs, emb_sizes)):
        w = jax.random.normal(keys[i], (nu, es), dtype=jnp.float32)
        tables.append(w)
        tab_cat = tab_cat.at[row_offsets[i] : row_offsets[i] + nu, :es].set(w)

    return tables, tab_cat, jnp.asarray(row_offsets, jnp.int32), tuple(emb_sizes)


if __name__ == "__main__":
    key = jax.random.PRNGKey(0)
    k_param, k_idx = jax.random.split(key)

    # Small synthetic config: 4 categorical features.
    num_uniqs = [7, 11, 5, 20]
    batch = 8

    tables, tab_cat, row_offsets, emb_sizes = build_emb_transform(num_uniqs, k_param)

    # Integer index inputs xe: (batch, num_feats), each column < num_uniqs[i].
    idx_keys = jax.random.split(k_idx, len(num_uniqs))
    cols = [
        jax.random.randint(idx_keys[i], (batch, 1), 0, nu, dtype=jnp.int32)
        for i, nu in enumerate(num_uniqs)
    ]
    xe = jnp.concatenate(cols, axis=1)

    out = emb_transform(xe, tab_cat, row_offsets, emb_sizes)
    out = jax.block_until_ready(out)

    # Pure-JAX reference (embedding lookup + concat).
    ref = jnp.concatenate(
        [jnp.take(tables[i], xe[:, i], axis=0) for i in range(len(num_uniqs))],
        axis=1,
    )
    assert out.shape == (batch, sum(emb_sizes)), out.shape
    assert jnp.allclose(out, ref, atol=1e-6), float(jnp.max(jnp.abs(out - ref)))

    print("KERNEL_OK")
</pallas_src>

<mosaic_0001>
module attributes {stable_mosaic.version = 11 : i64} {
  func.func @_emb_gather_kernel(%arg0: i32, %arg1: i32, %arg2: memref<4x8xi32, #tpu.memory_space<smem>>, %arg3: memref<4xi32, #tpu.memory_space<smem>>, %arg4: memref<43x128xf32, #tpu.memory_space<any>>, %arg5: memref<8x128xf32, #tpu.memory_space<vmem>>, %arg6: memref<8x128xf32, #tpu.memory_space<vmem>>, %arg7: memref<8x!tpu.dma_semaphore, #tpu.memory_space<semaphore_mem>>) attributes {dimension_semantics = [#tpu.dimension_semantics<parallel>, #tpu.dimension_semantics<parallel>], iteration_bounds = array<i64: 1, 4>, scalar_prefetch = 2 : i64, scratch_operands = 2 : i64, tpu.core_type = #tpu.core_type<tc>, window_params = [{}, {transform_indices = @transform_1, window_bounds = array<i64: 8, 128>}]} {
    %0 = arith.index_cast %arg1 : i32 to index
    %1 = memref.load %arg3[%0] : memref<4xi32, #tpu.memory_space<smem>>
    %c8_i32 = arith.constant 8 : i32
    %2 = arith.muli %arg0, %c8_i32 : i32
    %c0_i32 = arith.constant 0 : i32
    %3 = arith.addi %2, %c0_i32 : i32
    %4 = arith.index_cast %arg1 : i32 to index
    %5 = arith.index_cast %3 : i32 to index
    %6 = memref.load %arg2[%4, %5] : memref<4x8xi32, #tpu.memory_space<smem>>
    %7 = arith.addi %1, %6 : i32
    %c0_i32_0 = arith.constant 0 : i32
    %c0_i32_1 = arith.constant 0 : i32
    %8 = tpu.memref_slice %arg4[%7, %c0_i32_1] : memref<43x128xf32, #tpu.memory_space<any>> -> memref<1x128xf32, #tpu.memory_space<any>>
    %c0_i32_2 = arith.constant 0 : i32
    %c0_i32_3 = arith.constant 0 : i32
    %9 = tpu.memref_slice %arg6[%c0_i32_2, %c0_i32_3] : memref<8x128xf32, #tpu.memory_space<vmem>> -> memref<1x128xf32, #tpu.memory_space<vmem>>
    %10 = tpu.memref_slice %arg7[%c0_i32_0] : memref<8x!tpu.dma_semaphore, #tpu.memory_space<semaphore_mem>> -> memref<1x!tpu.dma_semaphore, #tpu.memory_space<semaphore_mem>>
    %11 = tpu.memref_squeeze %10 : memref<1x!tpu.dma_semaphore, #tpu.memory_space<semaphore_mem>> -> memref<!tpu.dma_semaphore, #tpu.memory_space<semaphore_mem>>
    tpu.enqueue_dma source(%8 : memref<1x128xf32, #tpu.memory_space<any>>) target(%9 : memref<1x128xf32, #tpu.memory_space<vmem>>) target_semaphore(%11 : memref<!tpu.dma_semaphore, #tpu.memory_space<semaphore_mem>>)
    %c1_i32 = arith.constant 1 : i32
    %12 = arith.addi %2, %c1_i32 : i32
    %13 = arith.index_cast %arg1 : i32 to index
    %14 = arith.index_cast %12 : i32 to index
    %15 = memref.load %arg2[%13, %14] : memref<4x8xi32, #tpu.memory_space<smem>>
    %16 = arith.addi %1, %15 : i32
    %c1_i32_4 = arith.constant 1 : i32
    %c0_i32_5 = arith.constant 0 : i32
    %17 = tpu.memref_slice %arg4[%16, %c0_i32_5] : memref<43x128xf32, #tpu.memory_space<any>> -> memref<1x128xf32, #tpu.memory_space<any>>
    %c1_i32_6 = arith.constant 1 : i32
    %c0_i32_7 = arith.constant 0 : i32
    %18 = tpu.memref_slice %arg6[%c1_i32_6, %c0_i32_7] : memref<8x128xf32, #tpu.memory_space<vmem>> -> memref<1x128xf32, #tpu.memory_space<vmem>>
    %19 = tpu.memref_slice %arg7[%c1_i32_4] : memref<8x!tpu.dma_semaphore, #tpu.memory_space<semaphore_mem>> -> memref<1x!tpu.dma_semaphore, #tpu.memory_space<semaphore_mem>>
    %20 = tpu.memref_squeeze %19 : memref<1x!tpu.dma_semaphore, #tpu.memory_space<semaphore_mem>> -> memref<!tpu.dma_semaphore, #tpu.memory_space<semaphore_mem>>
    tpu.enqueue_dma source(%17 : memref<1x128xf32, #tpu.memory_space<any>>) target(%18 : memref<1x128xf32, #tpu.memory_space<vmem>>) target_semaphore(%20 : memref<!tpu.dma_semaphore, #tpu.memory_space<semaphore_mem>>)
    %c2_i32 = arith.constant 2 : i32
    %21 = arith.addi %2, %c2_i32 : i32
    %22 = arith.index_cast %arg1 : i32 to index
    %23 = arith.index_cast %21 : i32 to index
    %24 = memref.load %arg2[%22, %23] : memref<4x8xi32, #tpu.memory_space<smem>>
    %25 = arith.addi %1, %24 : i32
    %c2_i32_8 = arith.constant 2 : i32
    %c0_i32_9 = arith.constant 0 : i32
    %26 = tpu.memref_slice %arg4[%25, %c0_i32_9] : memref<43x128xf32, #tpu.memory_space<any>> -> memref<1x128xf32, #tpu.memory_space<any>>
    %c2_i32_10 = arith.constant 2 : i32
    %c0_i32_11 = arith.constant 0 : i32
    %27 = tpu.memref_slice %arg6[%c2_i32_10, %c0_i32_11] : memref<8x128xf32, #tpu.memory_space<vmem>> -> memref<1x128xf32, #tpu.memory_space<vmem>>
    %28 = tpu.memref_slice %arg7[%c2_i32_8] : memref<8x!tpu.dma_semaphore, #tpu.memory_space<semaphore_mem>> -> memref<1x!tpu.dma_semaphore, #tpu.memory_space<semaphore_mem>>
    %29 = tpu.memref_squeeze %28 : memref<1x!tpu.dma_semaphore, #tpu.memory_space<semaphore_mem>> -> memref<!tpu.dma_semaphore, #tpu.memory_space<semaphore_mem>>
    tpu.enqueue_dma source(%26 : memref<1x128xf32, #tpu.memory_space<any>>) target(%27 : memref<1x128xf32, #tpu.memory_space<vmem>>) target_semaphore(%29 : memref<!tpu.dma_semaphore, #tpu.memory_space<semaphore_mem>>)
    %c3_i32 = arith.constant 3 : i32
    %30 = arith.addi %2, %c3_i32 : i32
    %31 = arith.index_cast %arg1 : i32 to index
    %32 = arith.index_cast %30 : i32 to index
    %33 = memref.load %arg2[%31, %32] : memref<4x8xi32, #tpu.memory_space<smem>>
    %34 = arith.addi %1, %33 : i32
    %c3_i32_12 = arith.constant 3 : i32
    %c0_i32_13 = arith.constant 0 : i32
    %35 = tpu.memref_slice %arg4[%34, %c0_i32_13] : memref<43x128xf32, #tpu.memory_space<any>> -> memref<1x128xf32, #tpu.memory_space<any>>
    %c3_i32_14 = arith.constant 3 : i32
    %c0_i32_15 = arith.constant 0 : i32
    %36 = tpu.memref_slice %arg6[%c3_i32_14, %c0_i32_15] : memref<8x128xf32, #tpu.memory_space<vmem>> -> memref<1x128xf32, #tpu.memory_space<vmem>>
    %37 = tpu.memref_slice %arg7[%c3_i32_12] : memref<8x!tpu.dma_semaphore, #tpu.memory_space<semaphore_mem>> -> memref<1x!tpu.dma_semaphore, #tpu.memory_space<semaphore_mem>>
    %38 = tpu.memref_squeeze %37 : memref<1x!tpu.dma_semaphore, #tpu.memory_space<semaphore_mem>> -> memref<!tpu.dma_semaphore, #tpu.memory_space<semaphore_mem>>
    tpu.enqueue_dma source(%35 : memref<1x128xf32, #tpu.memory_space<any>>) target(%36 : memref<1x128xf32, #tpu.memory_space<vmem>>) target_semaphore(%38 : memref<!tpu.dma_semaphore, #tpu.memory_space<semaphore_mem>>)
    %c4_i32 = arith.constant 4 : i32
    %39 = arith.addi %2, %c4_i32 : i32
    %40 = arith.index_cast %arg1 : i32 to index
    %41 = arith.index_cast %39 : i32 to index
    %42 = memref.load %arg2[%40, %41] : memref<4x8xi32, #tpu.memory_space<smem>>
    %43 = arith.addi %1, %42 : i32
    %c4_i32_16 = arith.constant 4 : i32
    %c0_i32_17 = arith.constant 0 : i32
    %44 = tpu.memref_slice %arg4[%43, %c0_i32_17] : memref<43x128xf32, #tpu.memory_space<any>> -> memref<1x128xf32, #tpu.memory_space<any>>
    %c4_i32_18 = arith.constant 4 : i32
    %c0_i32_19 = arith.constant 0 : i32
    %45 = tpu.memref_slice %arg6[%c4_i32_18, %c0_i32_19] : memref<8x128xf32, #tpu.memory_space<vmem>> -> memref<1x128xf32, #tpu.memory_space<vmem>>
    %46 = tpu.memref_slice %arg7[%c4_i32_16] : memref<8x!tpu.dma_semaphore, #tpu.memory_space<semaphore_mem>> -> memref<1x!tpu.dma_semaphore, #tpu.memory_space<semaphore_mem>>
    %47 = tpu.memref_squeeze %46 : memref<1x!tpu.dma_semaphore, #tpu.memory_space<semaphore_mem>> -> memref<!tpu.dma_semaphore, #tpu.memory_space<semaphore_mem>>
    tpu.enqueue_dma source(%44 : memref<1x128xf32, #tpu.memory_space<any>>) target(%45 : memref<1x128xf32, #tpu.memory_space<vmem>>) target_semaphore(%47 : memref<!tpu.dma_semaphore, #tpu.memory_space<semaphore_mem>>)
    %c5_i32 = arith.constant 5 : i32
    %48 = arith.addi %2, %c5_i32 : i32
    %49 = arith.index_cast %arg1 : i32 to index
    %50 = arith.index_cast %48 : i32 to index
    %51 = memref.load %arg2[%49, %50] : memref<4x8xi32, #tpu.memory_space<smem>>
    %52 = arith.addi %1, %51 : i32
    %c5_i32_20 = arith.constant 5 : i32
    %c0_i32_21 = arith.constant 0 : i32
    %53 = tpu.memref_slice %arg4[%52, %c0_i32_21] : memref<43x128xf32, #tpu.memory_space<any>> -> memref<1x128xf32, #tpu.memory_space<any>>
    %c5_i32_22 = arith.constant 5 : i32
    %c0_i32_23 = arith.constant 0 : i32
    %54 = tpu.memref_slice %arg6[%c5_i32_22, %c0_i32_23] : memref<8x128xf32, #tpu.memory_space<vmem>> -> memref<1x128xf32, #tpu.memory_space<vmem>>
    %55 = tpu.memref_slice %arg7[%c5_i32_20] : memref<8x!tpu.dma_semaphore, #tpu.memory_space<semaphore_mem>> -> memref<1x!tpu.dma_semaphore, #tpu.memory_space<semaphore_mem>>
    %56 = tpu.memref_squeeze %55 : memref<1x!tpu.dma_semaphore, #tpu.memory_space<semaphore_mem>> -> memref<!tpu.dma_semaphore, #tpu.memory_space<semaphore_mem>>
    tpu.enqueue_dma source(%53 : memref<1x128xf32, #tpu.memory_space<any>>) target(%54 : memref<1x128xf32, #tpu.memory_space<vmem>>) target_semaphore(%56 : memref<!tpu.dma_semaphore, #tpu.memory_space<semaphore_mem>>)
    %c6_i32 = arith.constant 6 : i32
    %57 = arith.addi %2, %c6_i32 : i32
    %58 = arith.index_cast %arg1 : i32 to index
    %59 = arith.index_cast %57 : i32 to index
    %60 = memref.load %arg2[%58, %59] : memref<4x8xi32, #tpu.memory_space<smem>>
    %61 = arith.addi %1, %60 : i32
    %c6_i32_24 = arith.constant 6 : i32
    %c0_i32_25 = arith.constant 0 : i32
    %62 = tpu.memref_slice %arg4[%61, %c0_i32_25] : memref<43x128xf32, #tpu.memory_space<any>> -> memref<1x128xf32, #tpu.memory_space<any>>
    %c6_i32_26 = arith.constant 6 : i32
    %c0_i32_27 = arith.constant 0 : i32
    %63 = tpu.memref_slice %arg6[%c6_i32_26, %c0_i32_27] : memref<8x128xf32, #tpu.memory_space<vmem>> -> memref<1x128xf32, #tpu.memory_space<vmem>>
    %64 = tpu.memref_slice %arg7[%c6_i32_24] : memref<8x!tpu.dma_semaphore, #tpu.memory_space<semaphore_mem>> -> memref<1x!tpu.dma_semaphore, #tpu.memory_space<semaphore_mem>>
    %65 = tpu.memref_squeeze %64 : memref<1x!tpu.dma_semaphore, #tpu.memory_space<semaphore_mem>> -> memref<!tpu.dma_semaphore, #tpu.memory_space<semaphore_mem>>
    tpu.enqueue_dma source(%62 : memref<1x128xf32, #tpu.memory_space<any>>) target(%63 : memref<1x128xf32, #tpu.memory_space<vmem>>) target_semaphore(%65 : memref<!tpu.dma_semaphore, #tpu.memory_space<semaphore_mem>>)
    %c7_i32 = arith.constant 7 : i32
    %66 = arith.addi %2, %c7_i32 : i32
    %67 = arith.index_cast %arg1 : i32 to index
    %68 = arith.index_cast %66 : i32 to index
    %69 = memref.load %arg2[%67, %68] : memref<4x8xi32, #tpu.memory_space<smem>>
    %70 = arith.addi %1, %69 : i32
    %c7_i32_28 = arith.constant 7 : i32
    %c0_i32_29 = arith.constant 0 : i32
    %71 = tpu.memref_slice %arg4[%70, %c0_i32_29] : memref<43x128xf32, #tpu.memory_space<any>> -> memref<1x128xf32, #tpu.memory_space<any>>
    %c7_i32_30 = arith.constant 7 : i32
    %c0_i32_31 = arith.constant 0 : i32
    %72 = tpu.memref_slice %arg6[%c7_i32_30, %c0_i32_31] : memref<8x128xf32, #tpu.memory_space<vmem>> -> memref<1x128xf32, #tpu.memory_space<vmem>>
    %73 = tpu.memref_slice %arg7[%c7_i32_28] : memref<8x!tpu.dma_semaphore, #tpu.memory_space<semaphore_mem>> -> memref<1x!tpu.dma_semaphore, #tpu.memory_space<semaphore_mem>>
    %74 = tpu.memref_squeeze %73 : memref<1x!tpu.dma_semaphore, #tpu.memory_space<semaphore_mem>> -> memref<!tpu.dma_semaphore, #tpu.memory_space<semaphore_mem>>
    tpu.enqueue_dma source(%71 : memref<1x128xf32, #tpu.memory_space<any>>) target(%72 : memref<1x128xf32, #tpu.memory_space<vmem>>) target_semaphore(%74 : memref<!tpu.dma_semaphore, #tpu.memory_space<semaphore_mem>>)
    %c0_i32_32 = arith.constant 0 : i32
    %c0_i32_33 = arith.constant 0 : i32
    %c0_i32_34 = arith.constant 0 : i32
    %75 = tpu.memref_slice %arg4[%c0_i32_33, %c0_i32_34] : memref<43x128xf32, #tpu.memory_space<any>> -> memref<1x128xf32, #tpu.memory_space<any>>
    %c0_i32_35 = arith.constant 0 : i32
    %c0_i32_36 = arith.constant 0 : i32
    %76 = tpu.memref_slice %arg6[%c0_i32_35, %c0_i32_36] : memref<8x128xf32, #tpu.memory_space<vmem>> -> memref<1x128xf32, #tpu.memory_space<vmem>>
    %77 = tpu.memref_slice %arg7[%c0_i32_32] : memref<8x!tpu.dma_semaphore, #tpu.memory_space<semaphore_mem>> -> memref<1x!tpu.dma_semaphore, #tpu.memory_space<semaphore_mem>>
    %78 = tpu.memref_squeeze %77 : memref<1x!tpu.dma_semaphore, #tpu.memory_space<semaphore_mem>> -> memref<!tpu.dma_semaphore, #tpu.memory_space<semaphore_mem>>
    tpu.wait_dma2 semaphore(%78 : memref<!tpu.dma_semaphore, #tpu.memory_space<semaphore_mem>>) src(%75 : memref<1x128xf32, #tpu.memory_space<any>>) dst(%76 : memref<1x128xf32, #tpu.memory_space<vmem>>)
    %c1_i32_37 = arith.constant 1 : i32
    %c0_i32_38 = arith.constant 0 : i32
    %c0_i32_39 = arith.constant 0 : i32
    %79 = tpu.memref_slice %arg4[%c0_i32_38, %c0_i32_39] : memref<43x128xf32, #tpu.memory_space<any>> -> memref<1x128xf32, #tpu.memory_space<any>>
    %c1_i32_40 = arith.constant 1 : i32
    %c0_i32_41 = arith.constant 0 : i32
    %80 = tpu.memref_slice %arg6[%c1_i32_40, %c0_i32_41] : memref<8x128xf32, #tpu.memory_space<vmem>> -> memref<1x128xf32, #tpu.memory_space<vmem>>
    %81 = tpu.memref_slice %arg7[%c1_i32_37] : memref<8x!tpu.dma_semaphore, #tpu.memory_space<semaphore_mem>> -> memref<1x!tpu.dma_semaphore, #tpu.memory_space<semaphore_mem>>
    %82 = tpu.memref_squeeze %81 : memref<1x!tpu.dma_semaphore, #tpu.memory_space<semaphore_mem>> -> memref<!tpu.dma_semaphore, #tpu.memory_space<semaphore_mem>>
    tpu.wait_dma2 semaphore(%82 : memref<!tpu.dma_semaphore, #tpu.memory_space<semaphore_mem>>) src(%79 : memref<1x128xf32, #tpu.memory_space<any>>) dst(%80 : memref<1x128xf32, #tpu.memory_space<vmem>>)
    %c2_i32_42 = arith.constant 2 : i32
    %c0_i32_43 = arith.constant 0 : i32
    %c0_i32_44 = arith.constant 0 : i32
    %83 = tpu.memref_slice %arg4[%c0_i32_43, %c0_i32_44] : memref<43x128xf32, #tpu.memory_space<any>> -> memref<1x128xf32, #tpu.memory_space<any>>
    %c2_i32_45 = arith.constant 2 : i32
    %c0_i32_46 = arith.constant 0 : i32
    %84 = tpu.memref_slice %arg6[%c2_i32_45, %c0_i32_46] : memref<8x128xf32, #tpu.memory_space<vmem>> -> memref<1x128xf32, #tpu.memory_space<vmem>>
    %85 = tpu.memref_slice %arg7[%c2_i32_42] : memref<8x!tpu.dma_semaphore, #tpu.memory_space<semaphore_mem>> -> memref<1x!tpu.dma_semaphore, #tpu.memory_space<semaphore_mem>>
    %86 = tpu.memref_squeeze %85 : memref<1x!tpu.dma_semaphore, #tpu.memory_space<semaphore_mem>> -> memref<!tpu.dma_semaphore, #tpu.memory_space<semaphore_mem>>
    tpu.wait_dma2 semaphore(%86 : memref<!tpu.dma_semaphore, #tpu.memory_space<semaphore_mem>>) src(%83 : memref<1x128xf32, #tpu.memory_space<any>>) dst(%84 : memref<1x128xf32, #tpu.memory_space<vmem>>)
    %c3_i32_47 = arith.constant 3 : i32
    %c0_i32_48 = arith.constant 0 : i32
    %c0_i32_49 = arith.constant 0 : i32
    %87 = tpu.memref_slice %arg4[%c0_i32_48, %c0_i32_49] : memref<43x128xf32, #tpu.memory_space<any>> -> memref<1x128xf32, #tpu.memory_space<any>>
    %c3_i32_50 = arith.constant 3 : i32
    %c0_i32_51 = arith.constant 0 : i32
    %88 = tpu.memref_slice %arg6[%c3_i32_50, %c0_i32_51] : memref<8x128xf32, #tpu.memory_space<vmem>> -> memref<1x128xf32, #tpu.memory_space<vmem>>
    %89 = tpu.memref_slice %arg7[%c3_i32_47] : memref<8x!tpu.dma_semaphore, #tpu.memory_space<semaphore_mem>> -> memref<1x!tpu.dma_semaphore, #tpu.memory_space<semaphore_mem>>
    %90 = tpu.memref_squeeze %89 : memref<1x!tpu.dma_semaphore, #tpu.memory_space<semaphore_mem>> -> memref<!tpu.dma_semaphore, #tpu.memory_space<semaphore_mem>>
    tpu.wait_dma2 semaphore(%90 : memref<!tpu.dma_semaphore, #tpu.memory_space<semaphore_mem>>) src(%87 : memref<1x128xf32, #tpu.memory_space<any>>) dst(%88 : memref<1x128xf32, #tpu.memory_space<vmem>>)
    %c4_i32_52 = arith.constant 4 : i32
    %c0_i32_53 = arith.constant 0 : i32
    %c0_i32_54 = arith.constant 0 : i32
    %91 = tpu.memref_slice %arg4[%c0_i32_53, %c0_i32_54] : memref<43x128xf32, #tpu.memory_space<any>> -> memref<1x128xf32, #tpu.memory_space<any>>
    %c4_i32_55 = arith.constant 4 : i32
    %c0_i32_56 = arith.constant 0 : i32
    %92 = tpu.memref_slice %arg6[%c4_i32_55, %c0_i32_56] : memref<8x128xf32, #tpu.memory_space<vmem>> -> memref<1x128xf32, #tpu.memory_space<vmem>>
    %93 = tpu.memref_slice %arg7[%c4_i32_52] : memref<8x!tpu.dma_semaphore, #tpu.memory_space<semaphore_mem>> -> memref<1x!tpu.dma_semaphore, #tpu.memory_space<semaphore_mem>>
    %94 = tpu.memref_squeeze %93 : memref<1x!tpu.dma_semaphore, #tpu.memory_space<semaphore_mem>> -> memref<!tpu.dma_semaphore, #tpu.memory_space<semaphore_mem>>
    tpu.wait_dma2 semaphore(%94 : memref<!tpu.dma_semaphore, #tpu.memory_space<semaphore_mem>>) src(%91 : memref<1x128xf32, #tpu.memory_space<any>>) dst(%92 : memref<1x128xf32, #tpu.memory_space<vmem>>)
    %c5_i32_57 = arith.constant 5 : i32
    %c0_i32_58 = arith.constant 0 : i32
    %c0_i32_59 = arith.constant 0 : i32
    %95 = tpu.memref_slice %arg4[%c0_i32_58, %c0_i32_59] : memref<43x128xf32, #tpu.memory_space<any>> -> memref<1x128xf32, #tpu.memory_space<any>>
    %c5_i32_60 = arith.constant 5 : i32
    %c0_i32_61 = arith.constant 0 : i32
    %96 = tpu.memref_slice %arg6[%c5_i32_60, %c0_i32_61] : memref<8x128xf32, #tpu.memory_space<vmem>> -> memref<1x128xf32, #tpu.memory_space<vmem>>
    %97 = tpu.memref_slice %arg7[%c5_i32_57] : memref<8x!tpu.dma_semaphore, #tpu.memory_space<semaphore_mem>> -> memref<1x!tpu.dma_semaphore, #tpu.memory_space<semaphore_mem>>
    %98 = tpu.memref_squeeze %97 : memref<1x!tpu.dma_semaphore, #tpu.memory_space<semaphore_mem>> -> memref<!tpu.dma_semaphore, #tpu.memory_space<semaphore_mem>>
    tpu.wait_dma2 semaphore(%98 : memref<!tpu.dma_semaphore, #tpu.memory_space<semaphore_mem>>) src(%95 : memref<1x128xf32, #tpu.memory_space<any>>) dst(%96 : memref<1x128xf32, #tpu.memory_space<vmem>>)
    %c6_i32_62 = arith.constant 6 : i32
    %c0_i32_63 = arith.constant 0 : i32
    %c0_i32_64 = arith.constant 0 : i32
    %99 = tpu.memref_slice %arg4[%c0_i32_63, %c0_i32_64] : memref<43x128xf32, #tpu.memory_space<any>> -> memref<1x128xf32, #tpu.memory_space<any>>
    %c6_i32_65 = arith.constant 6 : i32
    %c0_i32_66 = arith.constant 0 : i32
    %100 = tpu.memref_slice %arg6[%c6_i32_65, %c0_i32_66] : memref<8x128xf32, #tpu.memory_space<vmem>> -> memref<1x128xf32, #tpu.memory_space<vmem>>
    %101 = tpu.memref_slice %arg7[%c6_i32_62] : memref<8x!tpu.dma_semaphore, #tpu.memory_space<semaphore_mem>> -> memref<1x!tpu.dma_semaphore, #tpu.memory_space<semaphore_mem>>
    %102 = tpu.memref_squeeze %101 : memref<1x!tpu.dma_semaphore, #tpu.memory_space<semaphore_mem>> -> memref<!tpu.dma_semaphore, #tpu.memory_space<semaphore_mem>>
    tpu.wait_dma2 semaphore(%102 : memref<!tpu.dma_semaphore, #tpu.memory_space<semaphore_mem>>) src(%99 : memref<1x128xf32, #tpu.memory_space<any>>) dst(%100 : memref<1x128xf32, #tpu.memory_space<vmem>>)
    %c7_i32_67 = arith.constant 7 : i32
    %c0_i32_68 = arith.constant 0 : i32
    %c0_i32_69 = arith.constant 0 : i32
    %103 = tpu.memref_slice %arg4[%c0_i32_68, %c0_i32_69] : memref<43x128xf32, #tpu.memory_space<any>> -> memref<1x128xf32, #tpu.memory_space<any>>
    %c7_i32_70 = arith.constant 7 : i32
    %c0_i32_71 = arith.constant 0 : i32
    %104 = tpu.memref_slice %arg6[%c7_i32_70, %c0_i32_71] : memref<8x128xf32, #tpu.memory_space<vmem>> -> memref<1x128xf32, #tpu.memory_space<vmem>>
    %105 = tpu.memref_slice %arg7[%c7_i32_67] : memref<8x!tpu.dma_semaphore, #tpu.memory_space<semaphore_mem>> -> memref<1x!tpu.dma_semaphore, #tpu.memory_space<semaphore_mem>>
    %106 = tpu.memref_squeeze %105 : memref<1x!tpu.dma_semaphore, #tpu.memory_space<semaphore_mem>> -> memref<!tpu.dma_semaphore, #tpu.memory_space<semaphore_mem>>
    tpu.wait_dma2 semaphore(%106 : memref<!tpu.dma_semaphore, #tpu.memory_space<semaphore_mem>>) src(%103 : memref<1x128xf32, #tpu.memory_space<any>>) dst(%104 : memref<1x128xf32, #tpu.memory_space<vmem>>)
    %c0 = arith.constant 0 : index
    %c0_72 = arith.constant 0 : index
    %107 = vector.load %arg6[%c0, %c0_72] : memref<8x128xf32, #tpu.memory_space<vmem>>, vector<8x128xf32>
    %c0_73 = arith.constant 0 : index
    %c0_74 = arith.constant 0 : index
    %108 = vector.load %arg5[%c0_73, %c0_74] : memref<8x128xf32, #tpu.memory_space<vmem>>, vector<8x128xf32>
    tpu.vector_store %arg5[%c0_73, %c0_74], %107 {strides = array<i32>} : memref<8x128xf32, #tpu.memory_space<vmem>>, vector<8x128xf32>,
    return
  }
  func.func @transform_1(%arg0: i32, %arg1: i32, %arg2: memref<4x8xi32, #tpu.memory_space<smem>>, %arg3: memref<4xi32, #tpu.memory_space<smem>>) -> (i32, i32) {
    %c0_i32 = arith.constant 0 : i32
    return %arg0, %arg1 : i32, i32
  }
}

</mosaic_0001>

<llo_original>
// kernel: emb_transform.1
$region0: #{emb_transform.1}
  #allocation0 [shape = 'u32[]', space=smem, size = 0x4, offset = 0x4, fixed_abs, tag = 'smem constant byte address 0x4 - core index']
  #allocation1 [shape = 'u32[72,128]{1,0:T(1,128)}', space=vmem, size = 0x9000, scoped, tag = 'internal scratch']
  #allocation2 [shape = 'f32[8,128]{1,0:T(8,128)}', space=vmem, size = 0x1000, scoped, tag = 'scratch operand']
  #allocation3 [shape = 's32[8]{0}', space=sflag, size = 0x20, scoped, tag = 'scratch operand']
  #allocation4 [shape = 's32[1]{0}', space=sflag, size = 0x4, scoped, tag = 'scoped memory for emb_transform.1']
  #allocation5 [shape = 'u8[2048]{0}', space=smem, size = 0x800, scoped, tag = 'prefetched SMEM operand 0']
  #allocation6 [shape = 'u8[512]{0}', space=smem, size = 0x200, scoped, tag = 'prefetched SMEM operand 1']
  #allocation7 [shape = 's32[]', space=sflag, size = 0x4, offset = 0, fixed_abs, tag = 'sflag constant byte address 0x0 - dummy sync flag']
  #allocation8 [shape = 's32[]', space=sflag, size = 0x4, offset = 0, fixed_abs, tag = 'sflag constant byte address 0x0 - dummy sync flag']
  #allocation9 [shape = 'u32[]', space=smem, size = 0x4, offset = 0x44, fixed_abs, tag = 'smem constant byte address 0x44 - assertion arg 0']
  #allocation10 [shape = 'u32[]', space=smem, size = 0x4, offset = 0x48, fixed_abs, tag = 'smem constant byte address 0x48 - assertion arg 1']
  #allocation11 [shape = 's32[]', space=sflag, size = 0x4, offset = 0, fixed_abs, tag = 'sflag constant byte address 0x0 - dummy sync flag']
  #allocation12 [shape = 's32[]', space=sflag, size = 0x4, offset = 0, fixed_abs, tag = 'sflag constant byte address 0x0 - dummy sync flag']
  #allocation13 [shape = 's32[]', space=sflag, size = 0x4, offset = 0, fixed_abs, tag = 'sflag constant byte address 0x0 - dummy sync flag']
  #allocation14 [shape = 's32[]', space=sflag, size = 0x4, offset = 0, fixed_abs, tag = 'sflag constant byte address 0x0 - dummy sync flag']
  #allocation15 [shape = 's32[]', space=sflag, size = 0x4, offset = 0, fixed_abs, tag = 'sflag constant byte address 0x0 - dummy sync flag']
  #allocation16 [shape = 's32[]', space=sflag, size = 0x4, offset = 0, fixed_abs, tag = 'sflag constant byte address 0x0 - dummy sync flag']
  #allocation17 [shape = 's32[]', space=sflag, size = 0x4, offset = 0, fixed_abs, tag = 'sflag constant byte address 0x0 - dummy sync flag']
  #allocation18 [shape = 's32[]', space=sflag, size = 0x4, offset = 0, fixed_abs, tag = 'sflag constant byte address 0x0 - dummy sync flag']
  #allocation19 [shape = 's32[]', space=sflag, size = 0x4, offset = 0, fixed_abs, tag = 'sflag constant byte address 0x0 - dummy sync flag']
  #allocation20 [shape = 's32[]', space=sflag, size = 0x4, offset = 0, fixed_abs, tag = 'sflag constant byte address 0x0 - dummy sync flag']
  #allocation21 [shape = 's32[]', space=sflag, size = 0x4, offset = 0, fixed_abs, tag = 'sflag constant byte address 0x0 - dummy sync flag']
  #allocation22 [shape = 's32[]', space=sflag, size = 0x4, offset = 0, fixed_abs, tag = 'sflag constant byte address 0x0 - dummy sync flag']
  #allocation23 [shape = 's32[]', space=sflag, size = 0x4, offset = 0, fixed_abs, tag = 'sflag constant byte address 0x0 - dummy sync flag']
  #allocation24 [shape = 's32[]', space=sflag, size = 0x4, offset = 0, fixed_abs, tag = 'sflag constant byte address 0x0 - dummy sync flag']
  %s0 = inlined_call_operand.hbm [shape: s32[4,8], index: 0, kind: input, shape index: {}]
  %s1 = inlined_call_operand.vmem [shape: s32[4], index: 1, kind: input, shape index: {}]
  %s2 = inlined_call_operand.hbm [shape: f32[43,128], index: 2, kind: input, shape index: {}]
  %s3 = inlined_call_operand.vmem [shape: f32[8,512], index: 3, kind: output, shape index: {}]
  %s4 = sld [smem:[#allocation0]]
  $region57: #{emb_transform.1} parent=0
    _
  %s6 = ssub.s32 1, %s4
  %s7 = scalar_select 0, %s6, %s4
  %s9 = sshll.u32 %s0, 4
  %s10 = int_to_ptr.hbm [resolvable:$true] %s9
  %12 = dma.hbm_to_smem %s10, 64, [#allocation5], [#allocation4]
  %s14 = sshll.u32 %s1, 4
  %s15 = int_to_ptr.vmem [resolvable:$true] %s14
  %17 = dma.vmem_to_smem %s15, 16, [#allocation6], [#allocation4]
  %19 = dma.done [#allocation4], 80
  %20 = sfence
  loop: start=0, step=1, limit=5
  $region2: #{emb_transform.1} parent=0 // loop_pre_header
    _
  $region3: #{emb_transform.1} parent=0 // loop_header
    %s22 = sphi 0, %s26
    %p23 = scmp.ge.s32.totalorder %s22, 5
    %s28 = sphi 0, %s38
    %s29 = sphi 0, %s34
    %s30 = sphi 0, %s28
    %s31 = sphi 0, %s29
    %s43 = sphi 0, %s45
    %s46 = sphi 0, %s43
    %s56 = sphi 0, %s46
  $region4: #{emb_transform.1} parent=0 // loop_header_branch
    %25 = sbr.rel (%p23) target = $region8
  $region5: #{emb_transform.1} parent=0 // loop_body
    %s27 = ssub.s32 %s22, 1
    %s32 = sadd.s32 1, %s29
    %p33 = scmp.ge.s32.totalorder %s32, 4
    %s34 = scalar_select %p33, 0, %s32
    %s35 = sadd.s32 1, %s28
    %s36 = scalar_select %p33, %s35, %s28
    %p37 = scmp.ge.s32.totalorder %s36, 1
    %s38 = scalar_select %p37, 0, %s36
    %s39 = ssub.s32 %s28, %s38
    %s40 = ssub.s32 %s29, %s34
    %s41 = sor.u32 %s39, %s40
    %p42 = scmp.eq.s32.totalorder %s41, 0
    %s44 = sadd.s32 %s43, 1
    %s45 = scalar_select %p42, %s43, %s44
    %p47 = pneg %p42
    %p48 = scmp.eq.s32.totalorder %s22, 3
    %p49 = por %p47, %p48
    %p50 = scmp.ne.s32.totalorder %s43, %s46
    %p51 = scmp.eq.s32.totalorder %s22, 0
    %p52 = por %p50, %p51
    %p53 = scmp.ne.s32.totalorder %s43, %s46
    %p54 = scmp.eq.s32.totalorder %s27, 3
    %p55 = por %p53, %p54
    %p57 = scmp.ne.s32.totalorder %s46, %s56
    %p58 = scmp.eq.s32.totalorder %s27, 0
    %p59 = por %p57, %p58
    %p60 = scmp.lt.s32.totalorder %s22, 4
    // Predicated region
    $region9: #{emb_transform.1} parent=5 // pred_check
      %p61 = pneg %p60
    $region10: #{emb_transform.1} parent=5 // pred_check_branch
      %63 = sbr.rel (%p61) target = $region12
    $region11: #{emb_transform.1} parent=5 // pred_region
      %p64 = pneg %p52
      %p65 = pneg %p49
      %p66 = scmp.lt.s32.totalorder %s28, 0
      %s67 = scalar_select %p66, %s28, 0
      %p68 = scmp.lt.s32.totalorder %s29, 3
      %s69 = scalar_select %p68, %s29, 3
      %s70 = smul.addr %s67, 4
      %s71 = sadd.s32 %s69, %s70
      %s72 = smul.addr %s71, 8
      %s73 = scalar_lea.vmem %s3, %s72
      %p74 = scmp.lt.s32.totalorder %s28, 0
      %s75 = scalar_select %p74, %s28, 0
      %p76 = scmp.lt.s32.totalorder %s29, 3
      %s77 = scalar_select %p76, %s29, 3
      %s78 = smul.addr %s75, 4
      %s79 = sadd.s32 %s77, %s78
      %s80 = smul.addr %s79, 8
      %s81 = scalar_lea.vmem %s3, %s80
      %s82 = sld [smem:[#allocation6 + %s29]]
      %s83 = smul.u32 %s28, 8
      %s84 = sshra.s32 %s83, 7
      %s85 = sand.u32 %s83, 127
      %s86 = sadd.s32 %s84, %s29
      %s87 = smul.u32 %s86, 128
      %s88 = sshra.s32 %s83, 7
      %s89 = sand.u32 %s83, 127
      %s90 = sadd.s32 %s87, %s89
      %s91 = sld [smem:[#allocation5 + %s90]]
      %s92 = sadd.s32 %s82, %s91
      %s93 = scalar_lea.hbm %s2, %s92
      // Predicated region
      $region13: #{emb_transform.1} parent=11 // pred_check
        _
      $region14: #{emb_transform.1} parent=11 // pred_check_branch
        %95 = sbr.rel target = $region16
      $region15: #{emb_transform.1} parent=11 // pred_region
        %96 = sst [smem:[#allocation9]] [#allocation8]
        %97 = sst [smem:[#allocation10]] [#allocation7]
      $region16: #{emb_transform.1} parent=11 // pred_fallthru
        _
      %99 = shalt.err (0)
      %s101 = sshll.u32 %s93, 4
      %s102 = int_to_ptr.hbm [resolvable:$true] %s101
      %s103 = sshll.u32 [#allocation2], 4
      %s104 = int_to_ptr.vmem [resolvable:$true] %s103
      %106 = dma.hbm_to_vmem [thread:$0]  %s102, 16, %s104, [#allocation3]
      %s107 = sadd.s32 %s83, 1
      %s108 = sshra.s32 %s107, 7
      %s109 = sand.u32 %s107, 127
      %s110 = sadd.s32 %s108, %s29
      %s111 = smul.u32 %s110, 128
      %s112 = sshra.s32 %s107, 7
      %s113 = sand.u32 %s107, 127
      %s114 = sadd.s32 %s111, %s113
      %s115 = sld [smem:[#allocation5 + %s114]]
      %s116 = sadd.s32 %s82, %s115
      %s117 = scalar_lea.hbm %s2, %s116
      %s118 = scalar_lea.vmem [#allocation2], 1
      %s119 = scalar_lea.sflag [#allocation3], 1
      // Predicated region
      $region17: #{emb_transform.1} parent=11 // pred_check
        _
      $region18: #{emb_transform.1} parent=11 // pred_check_branch
        %121 = sbr.rel target = $region20
      $region19: #{emb_transform.1} parent=11 // pred_region
        %122 = sst [smem:[#allocation9]] [#allocation12]
        %123 = sst [smem:[#allocation10]] [#allocation11]
      $region20: #{emb_transform.1} parent=11 // pred_fallthru
        _
      %125 = shalt.err (0)
      %s127 = sshll.u32 %s117, 4
      %s128 = int_to_ptr.hbm [resolvable:$true] %s127
      %s129 = sshll.u32 %s118, 4
      %s130 = int_to_ptr.vmem [resolvable:$true] %s129
      %132 = dma.hbm_to_vmem [thread:$0]  %s128, 16, %s130, %s119
      %s133 = sadd.s32 %s83, 2
      %s134 = sshra.s32 %s133, 7
      %s135 = sand.u32 %s133, 127
      %s136 = sadd.s32 %s134, %s29
      %s137 = smul.u32 %s136, 128
      %s138 = sshra.s32 %s133, 7
      %s139 = sand.u32 %s133, 127
      %s140 = sadd.s32 %s137, %s139
      %s141 = sld [smem:[#allocation5 + %s140]]
      %s142 = sadd.s32 %s82, %s141
      %s143 = scalar_lea.hbm %s2, %s142
      %s144 = scalar_lea.vmem [#allocation2], 2
      %s145 = scalar_lea.sflag [#allocation3], 2
      // Predicated region
      $region21: #{emb_transform.1} parent=11 // pred_check
        _
      $region22: #{emb_transform.1} parent=11 // pred_check_branch
        %147 = sbr.rel target = $region24
      $region23: #{emb_transform.1} parent=11 // pred_region
        %148 = sst [smem:[#allocation9]] [#allocation14]
        %149 = sst [smem:[#allocation10]] [#allocation13]
      $region24: #{emb_transform.1} parent=11 // pred_fallthru
        _
      %151 = shalt.err (0)
      %s153 = sshll.u32 %s143, 4
      %s154 = int_to_ptr.hbm [resolvable:$true] %s153
      %s155 = sshll.u32 %s144, 4
      %s156 = int_to_ptr.vmem [resolvable:$true] %s155
      %158 = dma.hbm_to_vmem [thread:$0]  %s154, 16, %s156, %s145
      %s159 = sadd.s32 %s83, 3
      %s160 = sshra.s32 %s159, 7
      %s161 = sand.u32 %s159, 127
      %s162 = sadd.s32 %s160, %s29
      %s163 = smul.u32 %s162, 128
      %s164 = sshra.s32 %s159, 7
      %s165 = sand.u32 %s159, 127
      %s166 = sadd.s32 %s163, %s165
      %s167 = sld [smem:[#allocation5 + %s166]]
      %s168 = sadd.s32 %s82, %s167
      %s169 = scalar_lea.hbm %s2, %s168
      %s170 = scalar_lea.vmem [#allocation2], 3
      %s171 = scalar_lea.sflag [#allocation3], 3
      // Predicated region
      $region25: #{emb_transform.1} parent=11 // pred_check
        _
      $region26: #{emb_transform.1} parent=11 // pred_check_branch
        %173 = sbr.rel target = $region28
      $region27: #{emb_transform.1} parent=11 // pred_region
        %174 = sst [smem:[#allocation9]] [#allocation16]
        %175 = sst [smem:[#allocation10]] [#allocation15]
      $region28: #{emb_transform.1} parent=11 // pred_fallthru
        _
      %177 = shalt.err (0)
      %s179 = sshll.u32 %s169, 4
      %s180 = int_to_ptr.hbm [resolvable:$true] %s179
      %s181 = sshll.u32 %s170, 4
      %s182 = int_to_ptr.vmem [resolvable:$true] %s181
      %184 = dma.hbm_to_vmem [thread:$0]  %s180, 16, %s182, %s171
      %s185 = sadd.s32 %s83, 4
      %s186 = sshra.s32 %s185, 7
      %s187 = sand.u32 %s185, 127
      %s188 = sadd.s32 %s186, %s29
      %s189 = smul.u32 %s188, 128
      %s190 = sshra.s32 %s185, 7
      %s191 = sand.u32 %s185, 127
      %s192 = sadd.s32 %s189, %s191
      %s193 = sld [smem:[#allocation5 + %s192]]
      %s194 = sadd.s32 %s82, %s193
      %s195 = scalar_lea.hbm %s2, %s194
      %s196 = scalar_lea.vmem [#allocation2], 4
      %s197 = scalar_lea.sflag [#allocation3], 4
      // Predicated region
      $region29: #{emb_transform.1} parent=11 // pred_check
        _
      $region30: #{emb_transform.1} parent=11 // pred_check_branch
        %199 = sbr.rel target = $region32
      $region31: #{emb_transform.1} parent=11 // pred_region
        %200 = sst [smem:[#allocation9]] [#allocation18]
        %201 = sst [smem:[#allocation10]] [#allocation17]
      $region32: #{emb_transform.1} parent=11 // pred_fallthru
        _
      %203 = shalt.err (0)
      %s205 = sshll.u32 %s195, 4
      %s206 = int_to_ptr.hbm [resolvable:$true] %s205
      %s207 = sshll.u32 %s196, 4
      %s208 = int_to_ptr.vmem [resolvable:$true] %s207
      %210 = dma.hbm_to_vmem [thread:$0]  %s206, 16, %s208, %s197
      %s211 = sadd.s32 %s83, 5
      %s212 = sshra.s32 %s211, 7
      %s213 = sand.u32 %s211, 127
      %s214 = sadd.s32 %s212, %s29
      %s215 = smul.u32 %s214, 128
      %s216 = sshra.s32 %s211, 7
      %s217 = sand.u32 %s211, 127
      %s218 = sadd.s32 %s215, %s217
      %s219 = sld [smem:[#allocation5 + %s218]]
      %s220 = sadd.s32 %s82, %s219
      %s221 = scalar_lea.hbm %s2, %s220
      %s222 = scalar_lea.vmem [#allocation2], 5
      %s223 = scalar_lea.sflag [#allocation3], 5
      // Predicated region
      $region33: #{emb_transform.1} parent=11 // pred_check
        _
      $region34: #{emb_transform.1} parent=11 // pred_check_branch
        %225 = sbr.rel target = $region36
      $region35: #{emb_transform.1} parent=11 // pred_region
        %226 = sst [smem:[#allocation9]] [#allocation20]
        %227 = sst [smem:[#allocation10]] [#allocation19]
      $region36: #{emb_transform.1} parent=11 // pred_fallthru
        _
      %229 = shalt.err (0)
      %s231 = sshll.u32 %s221, 4
      %s232 = int_to_ptr.hbm [resolvable:$true] %s231
      %s233 = sshll.u32 %s222, 4
      %s234 = int_to_ptr.vmem [resolvable:$true] %s233
      %236 = dma.hbm_to_vmem [thread:$0]  %s232, 16, %s234, %s223
      %s237 = sadd.s32 %s83, 6
      %s238 = sshra.s32 %s237, 7
      %s239 = sand.u32 %s237, 127
      %s240 = sadd.s32 %s238, %s29
      %s241 = smul.u32 %s240, 128
      %s242 = sshra.s32 %s237, 7
      %s243 = sand.u32 %s237, 127
      %s244 = sadd.s32 %s241, %s243
      %s245 = sld [smem:[#allocation5 + %s244]]
      %s246 = sadd.s32 %s82, %s245
      %s247 = scalar_lea.hbm %s2, %s246
      %s248 = scalar_lea.vmem [#allocation2], 6
      %s249 = scalar_lea.sflag [#allocation3], 6
      // Predicated region
      $region37: #{emb_transform.1} parent=11 // pred_check
        _
      $region38: #{emb_transform.1} parent=11 // pred_check_branch
        %251 = sbr.rel target = $region40
      $region39: #{emb_transform.1} parent=11 // pred_region
        %252 = sst [smem:[#allocation9]] [#allocation22]
        %253 = sst [smem:[#allocation10]] [#allocation21]
      $region40: #{emb_transform.1} parent=11 // pred_fallthru
        _
      %255 = shalt.err (0)
      %s257 = sshll.u32 %s247, 4
      %s258 = int_to_ptr.hbm [resolvable:$true] %s257
      %s259 = sshll.u32 %s248, 4
      %s260 = int_to_ptr.vmem [resolvable:$true] %s259
      %262 = dma.hbm_to_vmem [thread:$0]  %s258, 16, %s260, %s249
      %s263 = sadd.s32 %s83, 7
      %s264 = sshra.s32 %s263, 7
      %s265 = sand.u32 %s263, 127
      %s266 = sadd.s32 %s264, %s29
      %s267 = smul.u32 %s266, 128
      %s268 = sshra.s32 %s263, 7
      %s269 = sand.u32 %s263, 127
      %s270 = sadd.s32 %s267, %s269
      %s271 = sld [smem:[#allocation5 + %s270]]
      %s272 = sadd.s32 %s82, %s271
      %s273 = scalar_lea.hbm %s2, %s272
      %s274 = scalar_lea.vmem [#allocation2], 7
      %s275 = scalar_lea.sflag [#allocation3], 7
      // Predicated region
      $region41: #{emb_transform.1} parent=11 // pred_check
        _
      $region42: #{emb_transform.1} parent=11 // pred_check_branch
        %277 = sbr.rel target = $region44
      $region43: #{emb_transform.1} parent=11 // pred_region
        %278 = sst [smem:[#allocation9]] [#allocation24]
        %279 = sst [smem:[#allocation10]] [#allocation23]
      $region44: #{emb_transform.1} parent=11 // pred_fallthru
        _
      %281 = shalt.err (0)
      %s283 = sshll.u32 %s273, 4
      %s284 = int_to_ptr.hbm [resolvable:$true] %s283
      %s285 = sshll.u32 %s274, 4
      %s286 = int_to_ptr.vmem [resolvable:$true] %s285
      %288 = dma.hbm_to_vmem [thread:$0]  %s284, 16, %s286, %s275
      %s289 = smul.u32 1, 1
      %s290 = sshll.u32 %s289, 4
      %291 = dma.done [#allocation3], %s290
      %s292 = sshll.u32 %s289, 4
      %293 = dma.done %s119, %s292
      %s294 = sshll.u32 %s289, 4
      %295 = dma.done %s145, %s294
      %s296 = sshll.u32 %s289, 4
      %297 = dma.done %s171, %s296
      %s298 = sshll.u32 %s289, 4
      %299 = dma.done %s197, %s298
      %s300 = sshll.u32 %s289, 4
      %301 = dma.done %s223, %s300
      %s302 = sshll.u32 %s289, 4
      %303 = dma.done %s249, %s302
      %s304 = sshll.u32 %s289, 4
      %305 = dma.done %s275, %s304
      %v306 = vld [vmem:[#allocation2] sm:$0xff]
      %307 = vst [vmem:[%s81] sm:$0xff] %v306
      %p308 = scmp.lt.s32.totalorder %s28, 0
      %s309 = scalar_select %p308, %s28, 0
      %p310 = scmp.lt.s32.totalorder %s29, 3
      %s311 = scalar_select %p310, %s29, 3
      %s312 = smul.addr %s309, 4
      %s313 = sadd.s32 %s311, %s312
      %s314 = smul.addr %s313, 8
      %s315 = scalar_lea.vmem %s3, %s314
      // Predicated region
      $region45: #{emb_transform.1} parent=11 // pred_check
        %p316 = pneg %p49
      $region46: #{emb_transform.1} parent=11 // pred_check_branch
        %318 = sbr.rel (%p316) target = $region48
      $region47: #{emb_transform.1} parent=11 // pred_region
        _
      $region48: #{emb_transform.1} parent=11 // pred_fallthru
        _
    $region12: #{emb_transform.1} parent=5 // pred_fallthru
      _
    %p319 = scmp.le.s32.totalorder 1, %s22
    // Predicated region
    $region49: #{emb_transform.1} parent=5 // pred_check
      %p320 = pneg %p319
    $region50: #{emb_transform.1} parent=5 // pred_check_branch
      %322 = sbr.rel (%p320) target = $region52
    $region51: #{emb_transform.1} parent=5 // pred_region
      %s323 = ssub.s32 %s22, 1
      // Predicated region
      $region53: #{emb_transform.1} parent=51 // pred_check
        %p324 = pneg %p55
      $region54: #{emb_transform.1} parent=51 // pred_check_branch
        %326 = sbr.rel (%p324) target = $region56
      $region55: #{emb_transform.1} parent=51 // pred_region
        %p327 = scmp.lt.s32.totalorder %s30, 0
        %s328 = scalar_select %p327, %s30, 0
        %p329 = scmp.lt.s32.totalorder %s31, 3
        %s330 = scalar_select %p329, %s31, 3
        %s331 = smul.addr %s328, 4
        %s332 = sadd.s32 %s330, %s331
        %s333 = smul.addr %s332, 8
        %s334 = scalar_lea.vmem %s3, %s333
      $region56: #{emb_transform.1} parent=51 // pred_fallthru
        _
    $region52: #{emb_transform.1} parent=5 // pred_fallthru
      _
  $region6: #{emb_transform.1} parent=0 // loop_footer
    %s26 = sadd.s32 1, %s22
  $region7: #{emb_transform.1} parent=0 // loop_footer_branch
    %21 = sbr.rel target = $region3
  $region8: #{emb_transform.1} parent=0 // loop_exit
    _
  %335 = vsyncmov [#allocation3]
  %s336 = vpop.sfrf %335
  %p337 = scmp.eq.s32.totalorder %s336, 0
  %p338 = pneg %p337
  %340 = shalt.err (%p338)
  %s341 = scalar_lea.sflag [#allocation3], 1
  %342 = vsyncmov %s341
  %s343 = vpop.sfrf %342
  %p344 = scmp.eq.s32.totalorder %s343, 0
  %p345 = pneg %p344
  %347 = shalt.err (%p345)
  %s348 = scalar_lea.sflag [#allocation3], 2
  %349 = vsyncmov %s348
  %s350 = vpop.sfrf %349
  %p351 = scmp.eq.s32.totalorder %s350, 0
  %p352 = pneg %p351
  %354 = shalt.err (%p352)
  %s355 = scalar_lea.sflag [#allocation3], 3
  %356 = vsyncmov %s355
  %s357 = vpop.sfrf %356
  %p358 = scmp.eq.s32.totalorder %s357, 0
  %p359 = pneg %p358
  %361 = shalt.err (%p359)
  %s362 = scalar_lea.sflag [#allocation3], 4
  %363 = vsyncmov %s362
  %s364 = vpop.sfrf %363
  %p365 = scmp.eq.s32.totalorder %s364, 0
  %p366 = pneg %p365
  %368 = shalt.err (%p366)
  %s369 = scalar_lea.sflag [#allocation3], 5
  %370 = vsyncmov %s369
  %s371 = vpop.sfrf %370
  %p372 = scmp.eq.s32.totalorder %s371, 0
  %p373 = pneg %p372
  %375 = shalt.err (%p373)
  %s376 = scalar_lea.sflag [#allocation3], 6
  %377 = vsyncmov %s376
  %s378 = vpop.sfrf %377
  %p379 = scmp.eq.s32.totalorder %s378, 0
  %p380 = pneg %p379
  %382 = shalt.err (%p380)
  %s383 = scalar_lea.sflag [#allocation3], 7
  %384 = vsyncmov %s383
  %s385 = vpop.sfrf %384
  %p386 = scmp.eq.s32.totalorder %s385, 0
  %p387 = pneg %p386
  %389 = shalt.err (%p387)

</llo_original>
